<compile_context>
chip_gen: v6e
topology: v6e:2x2x1
jax: 0.10.0
libtpu: 0.0.40
codegen_flags: <defaults>
</compile_context>

<pallas_src>
import functools

import jax
import jax.numpy as jnp
from jax.experimental import pallas as pl
from jax.experimental.pallas import tpu as pltpu


def _classifier_kernel(x_ref, w_ref, b_ref, o_ref):
    # x_ref: (TB, D)   w_ref: (D, C)   b_ref: (1, C)   o_ref: (TB, C)
    y = jnp.dot(x_ref[...], w_ref[...], preferred_element_type=jnp.float32)
    o_ref[...] = (y + b_ref[...]).astype(o_ref.dtype)


def prepare_params(weight, bias, dtype=None):
    """One-time layout prep (call once, outside the hot loop).

    weight: (C, D) PyTorch nn.Linear layout  ->  (D, C) matmul layout
    bias:   (C,)                             ->  (1, C) f32 row
    dtype:  storage dtype for the weight (e.g. jnp.bfloat16 to match bf16
            activations); accumulation in the kernel is always f32.
    """
    weight = jnp.asarray(weight)
    bias = jnp.asarray(bias)
    dtype = weight.dtype if dtype is None else dtype
    w_t = weight.T.astype(dtype)                       # (D, C), resident tile
    b2 = bias.reshape(1, -1).astype(jnp.float32)       # (1, C)
    return w_t, b2


def _sublane_multiple(dtype):
    # Native sublane packing: 8 rows for 4-byte, 16 for 2-byte, 32 for 1-byte.
    return max(8, 32 // jnp.dtype(dtype).itemsize)


@functools.partial(jax.jit, static_argnames=("block_b",))
def classifier_forward(x, w_t, b2, *, block_b=1024):
    """Eval-mode Classifier forward.

    x:   (B, D)  activations (f32 or bf16)
    w_t: (D, C)  pre-laid-out weight from prepare_params
    b2:  (1, C)  f32 bias row from prepare_params
    returns (B, C) f32 logits
    """
    B, D = x.shape
    C = w_t.shape[1]

    sub = _sublane_multiple(x.dtype)
    if B <= sub:
        # Single tile covering the whole batch (block == full array dim).
        tb = B
    else:
        # Round requested tile to the dtype's sublane multiple and cap it at
        # ceil(B/2) so the grid has >= 2 steps (both TensorCores busy on v7x).
        req = max(sub, (block_b // sub) * sub)
        half = pl.cdiv(pl.cdiv(B, 2), sub) * sub
        tb = min(req, half)
    grid = (pl.cdiv(B, tb),)

    x_bytes = B * D * jnp.dtype(x.dtype).itemsize
    w_bytes = D * C * jnp.dtype(w_t.dtype).itemsize     # resident: read once
    o_bytes = B * C * 4
    cost = pl.CostEstimate(
        flops=2 * B * D * C,
        transcendentals=0,
        bytes_accessed=x_bytes + w_bytes + C * 4 + o_bytes,
    )

    return pl.pallas_call(
        _classifier_kernel,
        out_shape=jax.ShapeDtypeStruct((B, C), jnp.float32),
        grid=grid,
        in_specs=[
            pl.BlockSpec((tb, D), lambda i: (i, 0)),     # x: tiled over batch
            pl.BlockSpec((D, C), lambda i: (0, 0)),      # weight: resident
            pl.BlockSpec((1, C), lambda i: (0, 0)),      # bias: resident
        ],
        out_specs=pl.BlockSpec((tb, C), lambda i: (i, 0)),
        compiler_params=pltpu.CompilerParams(
            dimension_semantics=("parallel",)),
        cost_estimate=cost,
    )(x, w_t, b2)


def init_params(key, input_dim, num_classes):
    # Deterministic init mirroring nn.Linear shapes:
    #   weight: (num_classes, input_dim), bias: (num_classes,)
    kw, kb = jax.random.split(key)
    bound = 1.0 / jnp.sqrt(jnp.float32(input_dim))
    weight = jax.random.uniform(
        kw, (num_classes, input_dim), jnp.float32, minval=-bound, maxval=bound)
    bias = jax.random.uniform(
        kb, (num_classes,), jnp.float32, minval=-bound, maxval=bound)
    return weight, bias


if __name__ == "__main__":
    key = jax.random.PRNGKey(0)
    kx, kp = jax.random.split(key)

    batch = 8
    input_dim = 32      # small synthetic pooled-hidden size
    num_classes = 2

    x = jax.random.normal(kx, (batch, input_dim), jnp.float32)
    weight, bias = init_params(kp, input_dim, num_classes)

    # Layout prep hoisted out of the hot path (done once per parameter set).
    w_t, b2 = prepare_params(weight, bias)

    out = jax.block_until_ready(classifier_forward(x, w_t, b2))
    ref = x @ weight.T + bias
    assert out.shape == (batch, num_classes)
    assert out.dtype == jnp.float32
    assert jnp.allclose(out, ref, atol=1e-5, rtol=1e-5)

    # Multi-tile path (B > tile, non-multiple-of-8 tail).
    big_b = 40
    xb = jax.random.normal(jax.random.PRNGKey(1), (big_b, input_dim),
                           jnp.float32)
    out_big = jax.block_until_ready(
        classifier_forward(xb, w_t, b2, block_b=16))
    ref_big = xb @ weight.T + bias
    assert out_big.shape == (big_b, num_classes)
    assert jnp.allclose(out_big, ref_big, atol=1e-5, rtol=1e-5)

    # bf16 hot path: bf16 activations + bf16-resident weight, f32 accumulate.
    x_bf = xb.astype(jnp.bfloat16)
    w_bf, b_bf = prepare_params(weight, bias, dtype=jnp.bfloat16)
    out_bf = jax.block_until_ready(classifier_forward(x_bf, w_bf, b_bf))
    ref_bf = x_bf.astype(jnp.float32) @ weight.T.astype(
        jnp.float32) + bias
    assert out_bf.shape == (big_b, num_classes)
    assert jnp.allclose(out_bf, ref_bf, atol=3e-2, rtol=3e-2)

    print("KERNEL_OK")
</pallas_src>

<mosaic_0001>
module attributes {stable_mosaic.version = 11 : i64} {
  func.func @_classifier_kernel(%arg0: i32, %arg1: memref<8x32xf32, #tpu.memory_space<vmem>>, %arg2: memref<32x2xf32, #tpu.memory_space<vmem>>, %arg3: memref<1x2xf32, #tpu.memory_space<vmem>>, %arg4: memref<8x2xf32, #tpu.memory_space<vmem>>) attributes {dimension_semantics = [#tpu.dimension_semantics<parallel>], iteration_bounds = array<i64: 1>, scalar_prefetch = 0 : i64, scratch_operands = 0 : i64, tpu.core_type = #tpu.core_type<tc>, window_params = [{transform_indices = @transform_0, window_bounds = array<i64: 8, 32>}, {pipeline_mode = #tpu.pipeline_mode<synchronous>, transform_indices = @transform_1, window_bounds = array<i64: 32, 2>}, {pipeline_mode = #tpu.pipeline_mode<synchronous>, transform_indices = @transform_2, window_bounds = array<i64: 1, 2>}, {transform_indices = @transform_3, window_bounds = array<i64: 8, 2>}]} {
    %c0 = arith.constant 0 : index
    %c0_0 = arith.constant 0 : index
    %0 = vector.load %arg1[%c0, %c0_0] : memref<8x32xf32, #tpu.memory_space<vmem>>, vector<8x32xf32>
    %c0_1 = arith.constant 0 : index
    %c0_2 = arith.constant 0 : index
    %1 = vector.load %arg2[%c0_1, %c0_2] : memref<32x2xf32, #tpu.memory_space<vmem>>, vector<32x2xf32>
    %cst = arith.constant dense<0.000000e+00> : vector<8x2xf32>
    %2 = tpu.matmul %0, %1, %cst {dimension_numbers = #tpu.dot_dimension_numbers<[1], [0], [0], [1], [0, 0, 1, 1], [], []>} : vector<8x32xf32>, vector<32x2xf32>, vector<8x2xf32> -> vector<8x2xf32>
    %c0_3 = arith.constant 0 : index
    %c0_4 = arith.constant 0 : index
    %3 = vector.load %arg3[%c0_3, %c0_4] : memref<1x2xf32, #tpu.memory_space<vmem>>, vector<1x2xf32>
    %4 = vector.broadcast %3 : vector<1x2xf32> to vector<8x2xf32>
    %5 = arith.addf %2, %4 : vector<8x2xf32>
    %c0_5 = arith.constant 0 : index
    %c0_6 = arith.constant 0 : index
    %6 = vector.load %arg4[%c0_5, %c0_6] : memref<8x2xf32, #tpu.memory_space<vmem>>, vector<8x2xf32>
    tpu.vector_store %arg4[%c0_5, %c0_6], %5 {strides = array<i32>} : memref<8x2xf32, #tpu.memory_space<vmem>>, vector<8x2xf32>,
    return
  }
  func.func @transform_0(%arg0: i32) -> (i32, i32) {
    %c0_i32 = arith.constant 0 : i32
    %c0_i32_0 = arith.constant 0 : i32
    return %arg0, %c0_i32 : i32, i32
  }
  func.func @transform_1(%arg0: i32) -> (i32, i32) {
    %c0_i32 = arith.constant 0 : i32
    %c0_i32_0 = arith.constant 0 : i32
    %c0_i32_1 = arith.constant 0 : i32
    return %c0_i32, %c0_i32_0 : i32, i32
  }
  func.func @transform_2(%arg0: i32) -> (i32, i32) {
    %c0_i32 = arith.constant 0 : i32
    %c0_i32_0 = arith.constant 0 : i32
    %c0_i32_1 = arith.constant 0 : i32
    return %c0_i32, %c0_i32_0 : i32, i32
  }
  func.func @transform_3(%arg0: i32) -> (i32, i32) {
    %c0_i32 = arith.constant 0 : i32
    %c0_i32_0 = arith.constant 0 : i32
    return %arg0, %c0_i32 : i32, i32
  }
}

</mosaic_0001>

<llo_original>
// kernel: classifier_forward.1
$region0: #{classifier_forward.1}
  #allocation0 [shape = 'u32[]', space=smem, size = 0x4, offset = 0x4, fixed_abs, tag = 'smem constant byte address 0x4 - core index']
  #allocation1 [shape = 'u32[144,128]{1,0:T(1,128)}', space=vmem, size = 0x12000, scoped, tag = 'internal scratch']
  %s0 = inlined_call_operand.vmem [shape: f32[8,32], index: 0, kind: input, shape index: {}]
  %s1 = inlined_call_operand.vmem [shape: f32[32,2], index: 1, kind: input, shape index: {}]
  %s2 = inlined_call_operand.vmem [shape: f32[1,2], index: 2, kind: input, shape index: {}]
  %s3 = inlined_call_operand.vmem [shape: f32[8,2], index: 3, kind: output, shape index: {}]
  %s4 = sld [smem:[#allocation0]]
  $region22: #{classifier_forward.1} parent=0
    _
  %s6 = ssub.s32 1, %s4
  %s7 = scalar_select 0, %s6, %s4
  // Predicated region
  $region2: #{classifier_forward.1} parent=0 // pred_check
    _
  $region3: #{classifier_forward.1} parent=0 // pred_check_branch
    %9 = sbr.rel (0) target = $region5
  $region4: #{classifier_forward.1} parent=0 // pred_region
    _
  $region5: #{classifier_forward.1} parent=0 // pred_fallthru
    _
  // Predicated region
  $region6: #{classifier_forward.1} parent=0 // pred_check
    _
  $region7: #{classifier_forward.1} parent=0 // pred_check_branch
    %11 = sbr.rel (0) target = $region9
  $region8: #{classifier_forward.1} parent=0 // pred_region
    _
  $region9: #{classifier_forward.1} parent=0 // pred_fallthru
    _
  // Predicated region
  $region10: #{classifier_forward.1} parent=0 // pred_check
    _
  $region11: #{classifier_forward.1} parent=0 // pred_check_branch
    %13 = sbr.rel (0) target = $region13
  $region12: #{classifier_forward.1} parent=0 // pred_region
    _
  $region13: #{classifier_forward.1} parent=0 // pred_fallthru
    _
  %v14 = vld [vmem:[%s0] sm:$0xff]
  %v15 = vld [vmem:[%s1] sm:$0xff]
  %v16 = vld [vmem:[%s1 + $0x8] sm:$0xff]
  %v17 = vld [vmem:[%s1 + $0x10] sm:$0xff]
  %v18 = vld [vmem:[%s1 + $0x18] sm:$0xff]
  %v19 = vld [vmem:[%s2] sm:$0x1]
  %v21 = vlaneseq
  %v22 = vshrl.u32 %v21, 7
  %v23 = vsub.s32 0, %v22
  %v24 = vrot.slane %v19, %v23
  %vm26 = vcmask 261120
  %v28 = vsel %vm26, %v14, 0
  %30 = vmatprep.subr.mxu0 0.0
  %31 = vmatpush1.msra.mxu0 0.0
  %32 = vmatprep.subr.mxu0 0.0
  %33 = vmatpush1.msra.mxu0 0.0
  %34 = vmatprep.subr.mxu0 0.0
  %35 = vmatpush1.msra.mxu0 0.0
  %36 = vmatprep.subr.mxu0 0.0
  %37 = vmatpush1.msra.mxu0 0.0
  %38 = vmatprep.subr.mxu0 0.0
  %39 = vmatpush1.msra.mxu0 0.0
  %40 = vmatprep.subr.mxu0 0.0
  %41 = vmatpush1.msra.mxu0 0.0
  %42 = vmatprep.subr.mxu0 0.0
  %43 = vmatpush1.msra.mxu0 0.0
  %44 = vmatprep.subr.mxu0 0.0
  %45 = vmatpush1.msra.mxu0 0.0
  %46 = vmatprep.subr.mxu0 0.0
  %47 = vmatpush1.msra.mxu0 0.0
  %48 = vmatprep.subr.mxu0 0.0
  %49 = vmatpush1.msra.mxu0 0.0
  %50 = vmatprep.subr.mxu0 0.0
  %51 = vmatpush1.msra.mxu0 0.0
  %52 = vmatprep.subr.mxu0 0.0
  %53 = vmatpush1.msra.mxu0 0.0
  %54 = vmatprep.subr.mxu0 0.0
  %55 = vmatpush1.msra.mxu0 %v18
  %56 = vmatprep.subr.mxu0 0.0
  %57 = vmatpush1.msra.mxu0 %v17
  %58 = vmatprep.subr.mxu0 0.0
  %59 = vmatpush1.msra.mxu0 %v16
  %60 = vmatprep.subr.mxu0 0.0
  %61 = vmatpush1.msra.mxu0 %v15
  %62 = vmatprep.subr.mxu0 0.0
  %63 = vmatpush2.msra.mxu0 0.0
  %64 = vmatprep.subr.mxu0 0.0
  %65 = vmatpush2.msra.mxu0 0.0
  %66 = vmatprep.subr.mxu0 0.0
  %67 = vmatpush2.msra.mxu0 0.0
  %68 = vmatprep.subr.mxu0 0.0
  %69 = vmatpush2.msra.mxu0 0.0
  %70 = vmatprep.subr.mxu0 0.0
  %71 = vmatpush2.msra.mxu0 0.0
  %72 = vmatprep.subr.mxu0 0.0
  %73 = vmatpush2.msra.mxu0 0.0
  %74 = vmatprep.subr.mxu0 0.0
  %75 = vmatpush2.msra.mxu0 0.0
  %76 = vmatprep.subr.mxu0 0.0
  %77 = vmatpush2.msra.mxu0 0.0
  %78 = vmatprep.subr.mxu0 0.0
  %79 = vmatpush2.msra.mxu0 0.0
  %80 = vmatprep.subr.mxu0 0.0
  %81 = vmatpush2.msra.mxu0 0.0
  %82 = vmatprep.subr.mxu0 0.0
  %83 = vmatpush2.msra.mxu0 0.0
  %84 = vmatprep.subr.mxu0 0.0
  %85 = vmatpush2.msra.mxu0 0.0
  %86 = vmatprep.subr.mxu0 0.0
  %87 = vmatpush2.msra.mxu0 0.0
  %88 = vmatprep.subr.mxu0 0.0
  %89 = vmatpush2.msra.mxu0 0.0
  %90 = vmatprep.subr.mxu0 0.0
  %91 = vmatpush2.msra.mxu0 0.0
  %92 = vmatprep.subr.mxu0 0.0
  %93 = vmatpush2.msra.mxu0 0.0
  %94 = vmatprep.mubr.f32.mxu0 0.0
  %95 = vmatmul.mubr.f32.gmra.mxu0 %v28
  %v96 = vpop.f32.mrf.mxu0
  %v97 = vadd.f32 %v24, %v96
  %v98 = vpop.f32.mrf.mxu0
  %99 = vdwg.mxu0
  %vm100 = vcmask 15360
  %101 = vst.msk [vmem:[%s3] sm:$0xff] %vm100, %v97
  // Predicated region
  $region14: #{classifier_forward.1} parent=0 // pred_check
    _
  $region15: #{classifier_forward.1} parent=0 // pred_check_branch
    %103 = sbr.rel (0) target = $region17
  $region16: #{classifier_forward.1} parent=0 // pred_region
    _
  $region17: #{classifier_forward.1} parent=0 // pred_fallthru
    _
  // Predicated region
  $region18: #{classifier_forward.1} parent=0 // pred_check
    _
  $region19: #{classifier_forward.1} parent=0 // pred_check_branch
    %105 = sbr.rel (0) target = $region21
  $region20: #{classifier_forward.1} parent=0 // pred_region
    _
  $region21: #{classifier_forward.1} parent=0 // pred_fallthru
    _

</llo_original>
